<compile_context>
chip_gen: v7x
topology: tpu7x:2x2x1
jax: 0.10.0
libtpu: 0.0.40
codegen_flags: <defaults>
</compile_context>

<pallas_src>
import functools
import math

import jax
import jax.numpy as jnp
from jax.experimental import pallas as pl
from jax.experimental.pallas import tpu as pltpu

PHASE_BINS = 64          # N
MAG_BINS = 1024          # M
LANE = 128               # lane tile (last dim)
MAX_BLOCK_ROWS = 1024    # up to 1024*128 = 128K elems per grid step (~2.5 MiB/buf)
SUB_ROWS = 32            # rows per in-kernel sub-chunk (4 vregs per f32 array)
TARGET_GRID_STEPS = 8    # aim for >= 8 grid steps (v7x megacore sharding)


def _hires_forward_kernel(ph_ref, mg_ref, sig_ref, pgrad_ref, mgrad_ref, *,
                          phase_bins, mag_bins, sub_rows):
    block_rows = ph_ref.shape[0]

    theta_step = jnp.float32(2.0 * math.pi / phase_bins)    # phase table spacing
    phase_gscale = jnp.float32(2.0 * math.pi / phase_bins)  # phase_grad_scale
    mag_step = jnp.float32(6.0 / (mag_bins - 1))             # linspace(-3,3,M) spacing
    mag_lo = jnp.float32(-3.0)
    mag_gscale = jnp.float32(6.0 / mag_bins)                  # mag_grad_scale (as in module)

    def process(r0, nrows):
        sl = pl.ds(r0, nrows)  # static offset/size -> zero-cost view
        ph = jnp.clip(ph_ref[sl, :], 0, phase_bins - 1).astype(jnp.float32)
        mg = jnp.clip(mg_ref[sl, :], 0, mag_bins - 1).astype(jnp.float32)

        # mag_exp_table[mg] = exp(linspace(-3,3,M)[mg]) evaluated analytically (EUP).
        mag_vals = jnp.exp(mg * mag_step + mag_lo)
        mgrad_ref[sl, :] = mag_vals * mag_gscale   # store early: shorten live range

        # phase_cos_table / phase_grad_table are cos / -sin of k*2pi/N:
        # evaluate directly instead of a 64-entry select chain.
        theta = ph * theta_step
        sig_ref[sl, :] = jnp.cos(theta) * mag_vals
        pgrad_ref[sl, :] = jnp.sin(theta) * (-phase_gscale)

    # Statically-unrolled sub-chunk loop (static slices, bounded vreg pressure).
    for c in range(pl.cdiv(block_rows, sub_rows)):
        r0 = c * sub_rows
        process(r0, min(sub_rows, block_rows - r0))


def _choose_block_rows(rows: int) -> int:
    """Pick block rows: multiple of 8, >= ~TARGET_GRID_STEPS grid steps, <= MAX."""
    if rows <= 8:
        return rows                       # full-extent block (allowed by (8,128) rule)
    target = -(-rows // TARGET_GRID_STEPS)
    target = ((target + 7) // 8) * 8      # round up to a multiple of 8
    return int(max(8, min(MAX_BLOCK_ROWS, target)))


@functools.partial(jax.jit, static_argnames=("phase_bins", "mag_bins"))
def hires_tables_forward(phase_indices, mag_indices,
                         phase_bins=PHASE_BINS, mag_bins=MAG_BINS):
    """Pallas implementation of HighResolutionLookupTables.forward.

    Args:
      phase_indices: int array [D], values in [0, phase_bins-1]
      mag_indices:   int array [D], values in [0, mag_bins-1]
    Returns:
      (signal, phase_grad, mag_grad): float32 arrays of shape [D]
    """
    d = phase_indices.shape[0]
    rem = d % LANE

    ph = phase_indices.astype(jnp.int32)
    mg = mag_indices.astype(jnp.int32)
    if rem != 0:
        # TODO(synk): lane-ragged D (D % 128 != 0) still pays one pad copy over the
        # inputs and one output slice; a rank-1 blocked kernel would remove it.
        pad = LANE - rem
        ph = jnp.pad(ph, (0, pad))
        mg = jnp.pad(mg, (0, pad))
    rows = ph.shape[0] // LANE
    ph2 = ph.reshape(rows, LANE)
    mg2 = mg.reshape(rows, LANE)

    block_rows = _choose_block_rows(rows)
    grid = (pl.cdiv(rows, block_rows),)   # partial final block handled by Pallas

    kernel = functools.partial(
        _hires_forward_kernel,
        phase_bins=phase_bins, mag_bins=mag_bins, sub_rows=SUB_ROWS)

    blk = pl.BlockSpec((block_rows, LANE), lambda i: (i, 0))
    out_shape = tuple(jax.ShapeDtypeStruct((rows, LANE), jnp.float32)
                      for _ in range(3))

    sig2, pg2, mgr2 = pl.pallas_call(
        kernel,
        out_shape=out_shape,
        grid=grid,
        in_specs=[blk, blk],
        out_specs=(blk, blk, blk),
        compiler_params=pltpu.CompilerParams(
            dimension_semantics=("parallel",)),
    )(ph2, mg2)

    if rem != 0:
        return (sig2.reshape(-1)[:d],
                pg2.reshape(-1)[:d],
                mgr2.reshape(-1)[:d])
    return sig2.reshape(d), pg2.reshape(d), mgr2.reshape(d)


def _reference_forward(phase_indices, mag_indices,
                       phase_bins=PHASE_BINS, mag_bins=MAG_BINS):
    """Pure-JAX reference mirroring the PyTorch module exactly (table gathers)."""
    phase_values = jnp.linspace(0.0, 2.0 * math.pi, phase_bins + 1)[:-1]
    cos_table = jnp.cos(phase_values).astype(jnp.float32)
    pgrad_table = (-jnp.sin(phase_values)).astype(jnp.float32)
    exp_table = jnp.exp(jnp.linspace(-3.0, 3.0, mag_bins)).astype(jnp.float32)
    ph = jnp.clip(phase_indices.astype(jnp.int32), 0, phase_bins - 1)
    mg = jnp.clip(mag_indices.astype(jnp.int32), 0, mag_bins - 1)
    signal = cos_table[ph] * exp_table[mg]
    phase_grad = pgrad_table[ph] * jnp.float32(2.0 * math.pi / phase_bins)
    mag_grad = exp_table[mg] * jnp.float32(6.0 / mag_bins)
    return signal, phase_grad, mag_grad


if __name__ == "__main__":
    key = jax.random.PRNGKey(0)
    # D=96    -> rows=1 (full-extent block, single step)
    # D=1234  -> lane-ragged + partial final grid block (10 rows, block 8)
    # D=2048  -> no-pad path, 2 grid steps (megacore split)
    # D=9216  -> 72 rows, block 16 -> 5 steps incl. a partial final block
    for D in (96, 1234, 2048, 9216):
        k1, k2 = jax.random.split(jax.random.fold_in(key, D))
        phase_idx = jax.random.randint(k1, (D,), 0, PHASE_BINS, dtype=jnp.int32)
        mag_idx = jax.random.randint(k2, (D,), 0, MAG_BINS, dtype=jnp.int32)

        outs = hires_tables_forward(phase_idx, mag_idx)
        jax.block_until_ready(outs)

        refs = _reference_forward(phase_idx, mag_idx)
        names = ("signal", "phase_grad", "mag_grad")
        for name, got, want in zip(names, outs, refs):
            assert got.shape == want.shape, (name, got.shape, want.shape)
            assert jnp.allclose(got, want, rtol=1e-5, atol=1e-5), (
                f"{name} mismatch at D={D}: "
                f"max abs err {float(jnp.max(jnp.abs(got - want)))}")

    print("KERNEL_OK")
</pallas_src>

<mosaic_0001>
module attributes {stable_mosaic.version = 11 : i64} {
  func.func @_hires_forward_kernel(%arg0: i32, %arg1: memref<1x128xi32, #tpu.memory_space<vmem>>, %arg2: memref<1x128xi32, #tpu.memory_space<vmem>>, %arg3: memref<1x128xf32, #tpu.memory_space<vmem>>, %arg4: memref<1x128xf32, #tpu.memory_space<vmem>>, %arg5: memref<1x128xf32, #tpu.memory_space<vmem>>) attributes {dimension_semantics = [#tpu.dimension_semantics<parallel>], iteration_bounds = array<i64: 1>, scalar_prefetch = 0 : i64, scratch_operands = 0 : i64, tpu.core_type = #tpu.core_type<tc>, window_params = [{transform_indices = @transform_0, window_bounds = array<i64: 1, 128>}, {transform_indices = @transform_1, window_bounds = array<i64: 1, 128>}, {transform_indices = @transform_2, window_bounds = array<i64: 1, 128>}, {transform_indices = @transform_3, window_bounds = array<i64: 1, 128>}, {transform_indices = @transform_4, window_bounds = array<i64: 1, 128>}]} {
    %c0 = arith.constant 0 : index
    %c0_0 = arith.constant 0 : index
    %0 = vector.load %arg1[%c0, %c0_0] : memref<1x128xi32, #tpu.memory_space<vmem>>, vector<1x128xi32>
    %c0_i32 = arith.constant 0 : i32
    %c63_i32 = arith.constant 63 : i32
    %1 = vector.broadcast %c0_i32 : i32 to vector<1x128xi32>
    %2 = arith.maxsi %1, %0 : vector<1x128xi32>
    %3 = vector.broadcast %c63_i32 : i32 to vector<1x128xi32>
    %4 = arith.minsi %3, %2 : vector<1x128xi32>
    %5 = arith.sitofp %4 : vector<1x128xi32> to vector<1x128xf32>
    %c0_1 = arith.constant 0 : index
    %c0_2 = arith.constant 0 : index
    %6 = vector.load %arg2[%c0_1, %c0_2] : memref<1x128xi32, #tpu.memory_space<vmem>>, vector<1x128xi32>
    %c0_i32_3 = arith.constant 0 : i32
    %c1023_i32 = arith.constant 1023 : i32
    %7 = vector.broadcast %c0_i32_3 : i32 to vector<1x128xi32>
    %8 = arith.maxsi %7, %6 : vector<1x128xi32>
    %9 = vector.broadcast %c1023_i32 : i32 to vector<1x128xi32>
    %10 = arith.minsi %9, %8 : vector<1x128xi32>
    %11 = arith.sitofp %10 : vector<1x128xi32> to vector<1x128xf32>
    %cst = arith.constant 0.00586510263 : f32
    %12 = vector.broadcast %cst : f32 to vector<1x128xf32>
    %13 = arith.mulf %11, %12 : vector<1x128xf32>
    %cst_4 = arith.constant -3.000000e+00 : f32
    %14 = vector.broadcast %cst_4 : f32 to vector<1x128xf32>
    %15 = arith.addf %13, %14 : vector<1x128xf32>
    %16 = math.exp %15 : vector<1x128xf32>
    %cst_5 = arith.constant 0.005859375 : f32
    %17 = vector.broadcast %cst_5 : f32 to vector<1x128xf32>
    %18 = arith.mulf %16, %17 : vector<1x128xf32>
    %c0_6 = arith.constant 0 : index
    %c0_7 = arith.constant 0 : index
    %19 = vector.load %arg5[%c0_6, %c0_7] : memref<1x128xf32, #tpu.memory_space<vmem>>, vector<1x128xf32>
    tpu.vector_store %arg5[%c0_6, %c0_7], %18 {strides = array<i32>} : memref<1x128xf32, #tpu.memory_space<vmem>>, vector<1x128xf32>,
    %cst_8 = arith.constant 0.0981747731 : f32
    %20 = vector.broadcast %cst_8 : f32 to vector<1x128xf32>
    %21 = arith.mulf %5, %20 : vector<1x128xf32>
    %22 = math.cos %21 : vector<1x128xf32>
    %23 = arith.mulf %22, %16 : vector<1x128xf32>
    %c0_9 = arith.constant 0 : index
    %c0_10 = arith.constant 0 : index
    %24 = vector.load %arg3[%c0_9, %c0_10] : memref<1x128xf32, #tpu.memory_space<vmem>>, vector<1x128xf32>
    tpu.vector_store %arg3[%c0_9, %c0_10], %23 {strides = array<i32>} : memref<1x128xf32, #tpu.memory_space<vmem>>, vector<1x128xf32>,
    %25 = math.sin %21 : vector<1x128xf32>
    %cst_11 = arith.constant 0.000000e+00 : f32
    %cst_12 = arith.constant 0.0981747731 : f32
    %26 = arith.subf %cst_11, %cst_12 : f32
    %27 = vector.broadcast %26 : f32 to vector<1x128xf32>
    %28 = arith.mulf %25, %27 : vector<1x128xf32>
    %c0_13 = arith.constant 0 : index
    %c0_14 = arith.constant 0 : index
    %29 = vector.load %arg4[%c0_13, %c0_14] : memref<1x128xf32, #tpu.memory_space<vmem>>, vector<1x128xf32>
    tpu.vector_store %arg4[%c0_13, %c0_14], %28 {strides = array<i32>} : memref<1x128xf32, #tpu.memory_space<vmem>>, vector<1x128xf32>,
    return
  }
  func.func @transform_0(%arg0: i32) -> (i32, i32) {
    %c0_i32 = arith.constant 0 : i32
    %c0_i32_0 = arith.constant 0 : i32
    return %arg0, %c0_i32 : i32, i32
  }
  func.func @transform_1(%arg0: i32) -> (i32, i32) {
    %c0_i32 = arith.constant 0 : i32
    %c0_i32_0 = arith.constant 0 : i32
    return %arg0, %c0_i32 : i32, i32
  }
  func.func @transform_2(%arg0: i32) -> (i32, i32) {
    %c0_i32 = arith.constant 0 : i32
    %c0_i32_0 = arith.constant 0 : i32
    return %arg0, %c0_i32 : i32, i32
  }
  func.func @transform_3(%arg0: i32) -> (i32, i32) {
    %c0_i32 = arith.constant 0 : i32
    %c0_i32_0 = arith.constant 0 : i32
    return %arg0, %c0_i32 : i32, i32
  }
  func.func @transform_4(%arg0: i32) -> (i32, i32) {
    %c0_i32 = arith.constant 0 : i32
    %c0_i32_0 = arith.constant 0 : i32
    return %arg0, %c0_i32 : i32, i32
  }
}

</mosaic_0001>

<llo_original>
// kernel: hires_tables_forward.1
$region0: #{hires_tables_forward.1}
  #allocation0 [shape = 'u32[]', space=smem, size = 0x4, offset = 0x4, fixed_abs, tag = 'smem constant byte address 0x4 - core index']
  #allocation1 [shape = 'u32[144,128]{1,0:T(1,128)}', space=vmem, size = 0x12000, scoped, tag = 'internal scratch']
  %s0 = inlined_call_operand.vmem [shape: s32[1,128], index: 0, kind: input, shape index: {}]
  %s1 = inlined_call_operand.vmem [shape: s32[1,128], index: 1, kind: input, shape index: {}]
  %s2 = inlined_call_operand.vmem [shape: f32[1,128], index: 2, kind: output, shape index: {0}]
  %s3 = inlined_call_operand.vmem [shape: f32[1,128], index: 3, kind: output, shape index: {1}]
  %s4 = inlined_call_operand.vmem [shape: f32[1,128], index: 4, kind: output, shape index: {2}]
  %5 = xla_tuple %s2, %s3, %s4
  %s6 = sld [smem:[#allocation0]]
  $region34: #{hires_tables_forward.1} parent=0
    _
  %s8 = ssub.s32 1, %s6
  %s9 = scalar_select 0, %s8, %s6
  // Predicated region
  $region2: #{hires_tables_forward.1} parent=0 // pred_check
    _
  $region3: #{hires_tables_forward.1} parent=0 // pred_check_branch
    %11 = sbr.rel (0) target = $region5
  $region4: #{hires_tables_forward.1} parent=0 // pred_region
    _
  $region5: #{hires_tables_forward.1} parent=0 // pred_fallthru
    _
  // Predicated region
  $region6: #{hires_tables_forward.1} parent=0 // pred_check
    _
  $region7: #{hires_tables_forward.1} parent=0 // pred_check_branch
    %13 = sbr.rel (0) target = $region9
  $region8: #{hires_tables_forward.1} parent=0 // pred_region
    _
  $region9: #{hires_tables_forward.1} parent=0 // pred_fallthru
    _
  %v14 = vld [vmem:[%s0] sm:$0x1]
  %vm15 = vcmp.gt.s32.totalorder %v14, 0
  %v16 = vsel %vm15, %v14, 0
  %vm17 = vcmp.lt.s32.totalorder %v16, 63
  %v18 = vsel %vm17, %v16, 63
  %v19 = vcvt.s32.f32 %v18
  %v20 = vld [vmem:[%s1] sm:$0x1]
  %vm21 = vcmp.gt.s32.totalorder %v20, 0
  %v22 = vsel %vm21, %v20, 0
  %vm23 = vcmp.lt.s32.totalorder %v22, 1023
  %v24 = vsel %vm23, %v22, 1023
  %v25 = vcvt.s32.f32 %v24
  %v26 = vmul.f32 %v25, 0.0058651026
  %v27 = vadd.f32 %v26, -3.0
  %v28 = vmul.f32 %v27, 1.442695
  %v29 = vpow.pop %v28
  %v30 = vmul.f32 %v29, 0.005859375
  %31 = vst [vmem:[%s4] sm:$0x1] %v30
  %v32 = vmul.f32 %v19, 0.09817477
  %v33 = vand.u32 2147483647, %v32
  %vm34 = vcmp.le.f32.partialorder %v33, 0.7853982
  %vm35 = vcmp.lt.s32.totalorder %v32, 0
  %v36 = vand.u32 %v32, 2139095040
  %v37 = vshrl.u32 %v36, 23
  %v38 = vsub.s32 %v37, 127
  %v39 = vand.u32 2147483647, %v32
  %v40 = vand.u32 %v39, 8388607
  %v41 = vor.u32 %v40, 8388608
  %v42 = vsub.s32 0, %v41
  %v43 = vadd.s32 %v38, 1
  %vm44 = vcmp.gt.s32.totalorder %v43, 0
  %v45 = vsel %vm44, %v43, 0
  %v46 = vshrl.u32 %v45, 5
  %v47 = vand.u32 %v45, 31
  %v48 = vsub.s32 32, %v47
  %v49 = vshrl.u32 683565275, %v48
  %v50 = vshll.u32 683565275, %v47
  %v51 = vshrl.u32 2475754826, %v48
  %v52 = vor.u32 %v50, %v51
  %v53 = vshll.u32 2475754826, %v47
  %v54 = vshrl.u32 2131351028, %v48
  %v55 = vor.u32 %v53, %v54
  %v56 = vshll.u32 2131351028, %v47
  %v57 = vshrl.u32 2102212464, %v48
  %v58 = vor.u32 %v56, %v57
  %v59 = vshll.u32 2102212464, %v47
  %v60 = vshrl.u32 920167782, %v48
  %v61 = vor.u32 %v59, %v60
  %v62 = vshll.u32 920167782, %v47
  %v63 = vshrl.u32 1326507024, %v48
  %v64 = vor.u32 %v62, %v63
  %vm65 = vcmp.lt.s32.totalorder %v46, 1
  %vm66 = vcmp.lt.s32.totalorder %v46, 2
  %vm67 = vcmp.lt.s32.totalorder %v46, 3
  %vm68 = vcmp.lt.s32.totalorder %v46, 4
  %v69 = vsel %vm65, %v49, %v52
  %v70 = vsel %vm68, %v58, 2102212464
  %v71 = vsel %vm67, %v55, %v70
  %v72 = vsel %vm66, %v69, %v71
  %v73 = vsel %vm65, %v52, %v55
  %v74 = vsel %vm68, %v61, 920167782
  %v75 = vsel %vm67, %v58, %v74
  %v76 = vsel %vm66, %v73, %v75
  %v77 = vsel %vm65, %v55, %v58
  %v78 = vsel %vm68, %v64, 1326507024
  %v79 = vsel %vm67, %v61, %v78
  %v80 = vsel %vm66, %v77, %v79
  %v81 = vshll.u32 %v41, 8
  %v82 = vmul.u32.u64.compose %v81, %v80
  %v83 = vextract.low.u32 %v82
  %v84 = vextract.high.u32 %v82
  %v85 = vmul.u32.u64.compose %v81, %v76
  %v86 = vextract.low.u32 %v85
  %v87 = vextract.high.u32 %v85
  %v88 = vmul.u32 %v81, %v72
  %v89 = vadd.s32 %v84, %v86
  %vm90 = vc.u32 %v84, %v86
  %v91 = vadd.s32 %v87, 1
  %v92 = vsel %vm90, %v91, %v87
  %v93 = vadd.s32 %v88, %v92
  %v94 = vadd.s32 %v93, 536870912
  %v95 = vshrl.u32 %v94, 30
  %v96 = vshll.u32 %v95, 30
  %v97 = vsub.s32 %v93, %v96
  %vm98 = vcmp.lt.s32.totalorder %v97, 0
  %v99 = vsub.s32 0, %v97
  %v100 = vsel %vm98, %v99, %v97
  %v101 = vclz %v100
  %v102 = vsub.s32 %v101, 2
  %vm103 = vcmp.gt.s32.totalorder 0, %v102
  %v104 = vsel %vm103, 0, %v102
  %v105 = vsub.s32 32, %v104
  %v106 = vshll.u32 %v97, %v104
  %v107 = vshrl.u32 %v89, %v105
  %v108 = vor.u32 %v106, %v107
  %v109 = vsub.s32 4294967266, %v104
  %v110 = vadd.s32 %v109, 127
  %v111 = vshll.u32 %v110, 23
  %v112 = vor.u32 4788187, %v111
  %v113 = vand.u32 2147483647, %v112
  %v115 = vcvt.s32.f32 %v108
  %v116 = vmul.f32 %v115, %v113
  %v117 = vxor.u32 %v116, 2147483648
  %v118 = vsel %vm35, %v117, %v116
  %v119 = vsub.s32 4, %v95
  %v120 = vsel %vm35, %v119, %v95
  %v121 = vsel %vm34, %v32, %v118
  %v122 = vsel %vm34, 0, %v120
  %v123 = vcosq.f32.pop %v121
  %v124 = vsinq.f32.pop %v121
  %vm125 = vweird.f32 %v32
  %v126 = vand.u32 %v122, 3
  %vm127 = vcmp.lt.s32.totalorder %v126, 2
  %vm128 = vcmp.eq.s32.totalorder %v126, 0
  %v129 = vxor.u32 %v124, 2147483648
  %v130 = vsel %vm128, %v123, %v129
  %vm131 = vcmp.eq.s32.totalorder %v126, 2
  %v132 = vxor.u32 %v123, 2147483648
  %v133 = vsel %vm131, %v132, %v124
  %v134 = vsel %vm127, %v130, %v133
  %v135 = vsel %vm125, nan, %v134
  %v136 = vmul.f32 %v135, %v29
  %137 = vst [vmem:[%s2] sm:$0x1] %v136
  %v138 = vand.u32 2147483647, %v32
  %vm139 = vcmp.le.f32.partialorder %v138, 0.7853982
  %vm140 = vcmp.lt.s32.totalorder %v32, 0
  %v141 = vand.u32 %v32, 2139095040
  %v142 = vshrl.u32 %v141, 23
  %v143 = vsub.s32 %v142, 127
  %v144 = vand.u32 2147483647, %v32
  %v145 = vand.u32 %v144, 8388607
  %v146 = vor.u32 %v145, 8388608
  %v147 = vsub.s32 0, %v146
  %v148 = vadd.s32 %v143, 1
  %vm149 = vcmp.gt.s32.totalorder %v148, 0
  %v150 = vsel %vm149, %v148, 0
  %v151 = vshrl.u32 %v150, 5
  %v152 = vand.u32 %v150, 31
  %v153 = vsub.s32 32, %v152
  %v154 = vshrl.u32 683565275, %v153
  %v155 = vshll.u32 683565275, %v152
  %v156 = vshrl.u32 2475754826, %v153
  %v157 = vor.u32 %v155, %v156
  %v158 = vshll.u32 2475754826, %v152
  %v159 = vshrl.u32 2131351028, %v153
  %v160 = vor.u32 %v158, %v159
  %v161 = vshll.u32 2131351028, %v152
  %v162 = vshrl.u32 2102212464, %v153
  %v163 = vor.u32 %v161, %v162
  %v164 = vshll.u32 2102212464, %v152
  %v165 = vshrl.u32 920167782, %v153
  %v166 = vor.u32 %v164, %v165
  %v167 = vshll.u32 920167782, %v152
  %v168 = vshrl.u32 1326507024, %v153
  %v169 = vor.u32 %v167, %v168
  %vm170 = vcmp.lt.s32.totalorder %v151, 1
  %vm171 = vcmp.lt.s32.totalorder %v151, 2
  %vm172 = vcmp.lt.s32.totalorder %v151, 3
  %vm173 = vcmp.lt.s32.totalorder %v151, 4
  %v174 = vsel %vm170, %v154, %v157
  %v175 = vsel %vm173, %v163, 2102212464
  %v176 = vsel %vm172, %v160, %v175
  %v177 = vsel %vm171, %v174, %v176
  %v178 = vsel %vm170, %v157, %v160
  %v179 = vsel %vm173, %v166, 920167782
  %v180 = vsel %vm172, %v163, %v179
  %v181 = vsel %vm171, %v178, %v180
  %v182 = vsel %vm170, %v160, %v163
  %v183 = vsel %vm173, %v169, 1326507024
  %v184 = vsel %vm172, %v166, %v183
  %v185 = vsel %vm171, %v182, %v184
  %v186 = vshll.u32 %v146, 8
  %v187 = vmul.u32.u64.compose %v186, %v185
  %v188 = vextract.low.u32 %v187
  %v189 = vextract.high.u32 %v187
  %v190 = vmul.u32.u64.compose %v186, %v181
  %v191 = vextract.low.u32 %v190
  %v192 = vextract.high.u32 %v190
  %v193 = vmul.u32 %v186, %v177
  %v194 = vadd.s32 %v189, %v191
  %vm195 = vc.u32 %v189, %v191
  %v196 = vadd.s32 %v192, 1
  %v197 = vsel %vm195, %v196, %v192
  %v198 = vadd.s32 %v193, %v197
  %v199 = vadd.s32 %v198, 536870912
  %v200 = vshrl.u32 %v199, 30
  %v201 = vshll.u32 %v200, 30
  %v202 = vsub.s32 %v198, %v201
  %vm203 = vcmp.lt.s32.totalorder %v202, 0
  %v204 = vsub.s32 0, %v202
  %v205 = vsel %vm203, %v204, %v202
  %v206 = vclz %v205
  %v207 = vsub.s32 %v206, 2
  %vm208 = vcmp.gt.s32.totalorder 0, %v207
  %v209 = vsel %vm208, 0, %v207
  %v210 = vsub.s32 32, %v209
  %v211 = vshll.u32 %v202, %v209
  %v212 = vshrl.u32 %v194, %v210
  %v213 = vor.u32 %v211, %v212
  %v214 = vsub.s32 4294967266, %v209
  %v215 = vadd.s32 %v214, 127
  %v216 = vshll.u32 %v215, 23
  %v217 = vor.u32 4788187, %v216
  %v218 = vand.u32 2147483647, %v217
  %v220 = vcvt.s32.f32 %v213
  %v221 = vmul.f32 %v220, %v218
  %v222 = vxor.u32 %v221, 2147483648
  %v223 = vsel %vm140, %v222, %v221
  %v224 = vsub.s32 4, %v200
  %v225 = vsel %vm140, %v224, %v200
  %v226 = vsel %vm139, %v32, %v223
  %v227 = vsel %vm139, 0, %v225
  %v228 = vcosq.f32.pop %v226
  %v229 = vsinq.f32.pop %v226
  %vm230 = vweird.f32 %v32
  %v231 = vadd.s32 %v227, 3
  %v232 = vand.u32 %v231, 3
  %vm233 = vcmp.lt.s32.totalorder %v232, 2
  %vm234 = vcmp.eq.s32.totalorder %v232, 0
  %v235 = vxor.u32 %v229, 2147483648
  %v236 = vsel %vm234, %v228, %v235
  %vm237 = vcmp.eq.s32.totalorder %v232, 2
  %v238 = vxor.u32 %v228, 2147483648
  %v239 = vsel %vm237, %v238, %v229
  %v240 = vsel %vm233, %v236, %v239
  %v241 = vsel %vm230, nan, %v240
  %v242 = vmul.f32 %v241, -0.09817477
  %243 = vst [vmem:[%s3] sm:$0x1] %v242
  // Predicated region
  $region10: #{hires_tables_forward.1} parent=0 // pred_check
    _
  $region11: #{hires_tables_forward.1} parent=0 // pred_check_branch
    %245 = sbr.rel (0) target = $region13
  $region12: #{hires_tables_forward.1} parent=0 // pred_region
    _
  $region13: #{hires_tables_forward.1} parent=0 // pred_fallthru
    _
  // Predicated region
  $region14: #{hires_tables_forward.1} parent=0 // pred_check
    _
  $region15: #{hires_tables_forward.1} parent=0 // pred_check_branch
    %247 = sbr.rel (0) target = $region17
  $region16: #{hires_tables_forward.1} parent=0 // pred_region
    _
  $region17: #{hires_tables_forward.1} parent=0 // pred_fallthru
    _
  // Predicated region
  $region18: #{hires_tables_forward.1} parent=0 // pred_check
    _
  $region19: #{hires_tables_forward.1} parent=0 // pred_check_branch
    %249 = sbr.rel (0) target = $region21
  $region20: #{hires_tables_forward.1} parent=0 // pred_region
    _
  $region21: #{hires_tables_forward.1} parent=0 // pred_fallthru
    _
  // Predicated region
  $region22: #{hires_tables_forward.1} parent=0 // pred_check
    _
  $region23: #{hires_tables_forward.1} parent=0 // pred_check_branch
    %251 = sbr.rel (0) target = $region25
  $region24: #{hires_tables_forward.1} parent=0 // pred_region
    _
  $region25: #{hires_tables_forward.1} parent=0 // pred_fallthru
    _
  // Predicated region
  $region26: #{hires_tables_forward.1} parent=0 // pred_check
    _
  $region27: #{hires_tables_forward.1} parent=0 // pred_check_branch
    %253 = sbr.rel (0) target = $region29
  $region28: #{hires_tables_forward.1} parent=0 // pred_region
    _
  $region29: #{hires_tables_forward.1} parent=0 // pred_fallthru
    _
  // Predicated region
  $region30: #{hires_tables_forward.1} parent=0 // pred_check
    _
  $region31: #{hires_tables_forward.1} parent=0 // pred_check_branch
    %255 = sbr.rel (0) target = $region33
  $region32: #{hires_tables_forward.1} parent=0 // pred_region
    _
  $region33: #{hires_tables_forward.1} parent=0 // pred_fallthru
    _

</llo_original>
